<compile_context>
chip_gen: v7x
topology: tpu7x:2x2x1
jax: 0.10.0
libtpu: 0.0.40
codegen_flags: <defaults>
</compile_context>

<pallas_src>
import jax
import jax.numpy as jnp
from jax.experimental import pallas as pl
from jax.experimental.pallas import tpu as pltpu


def deepfm_kernel(lin_ref, x_ref, sel_ref,
                  w1_ref, b1_ref, w2_ref, b2_ref, w3_ref,
                  out_ref):
    """One batch tile.  Batch is on the lane (last) axis of every operand."""
    x = x_ref[...]                                                       # (FD, BT)

    # ---- FM 2nd-order part: field sums via MXU against a 0/1 selection matrix ----
    s = jnp.dot(sel_ref[...], x, preferred_element_type=jnp.float32)    # (D, BT)
    sum_square = jnp.sum(s * s, axis=0, keepdims=True)                  # (1, BT)
    square_sum = jnp.sum(x * x, axis=0, keepdims=True)                  # (1, BT)
    fm_part = 0.5 * (sum_square - square_sum)                           # (1, BT)

    # ---- deep MLP (batch on lanes): (h, in) @ (in, BT) ----
    h1 = jnp.dot(w1_ref[...], x, preferred_element_type=jnp.float32) + b1_ref[...]
    h1 = jnp.maximum(h1, 0.0)            # ReLU; dropout = identity (eval mode)
    h2 = jnp.dot(w2_ref[...], h1, preferred_element_type=jnp.float32) + b2_ref[...]
    h2 = jnp.maximum(h2, 0.0)
    deep_out = jnp.dot(w3_ref[...], h2, preferred_element_type=jnp.float32)  # (1, BT)

    # ---- combine (linear part + both scalar biases already folded in) + sigmoid ----
    out_ref[...] = jax.nn.sigmoid(lin_ref[...] + fm_part + deep_out)    # lane-dense store


def deepfm_forward(x_idx, params, *, batch_tile=256):
    """x_idx: (B, F) int32 feature indices.  Returns (B, 1) probabilities."""
    B, F = x_idx.shape
    D = params["embed_table"].shape[1]
    FD = F * D
    h1 = params["w1"].shape[1]
    h2 = params["w2"].shape[1]

    # ---- glue: one fused gather over the concatenated tables ----
    flat_idx = x_idx + params["field_offsets"][None, :]                   # (B, F)
    x_embed = jnp.take(params["embed_table"], flat_idx, axis=0)           # (B, F, D)
    lin_vals = jnp.take(params["linear_table"], flat_idx, axis=0)         # (B, F)

    # 1st-order part; linear bias and deep-out bias folded in wrapper-side.
    lin_row = (jnp.sum(lin_vals, axis=1)
               + params["linear_bias"][0] + params["b3"][0]
               ).astype(jnp.float32).reshape(1, B)                        # (1, B)

    # Batch on the lane axis.
    x_t = x_embed.reshape(B, FD).T.astype(jnp.float32)                    # (FD, B)

    # Pad batch to a multiple of the tile.  batch_tile=256 keeps everything
    # (double-buffered x tile + resident weights + (h1,BT)/(h2,BT) live
    # intermediates) comfortably inside v7x's 64 MiB VMEM; it can be raised
    # (512-1024) on v5e/v6e for large batches to amortize per-step overhead.
    BT = batch_tile
    B_pad = ((B + BT - 1) // BT) * BT
    if B_pad != B:
        pad = B_pad - B
        x_t = jnp.pad(x_t, ((0, 0), (0, pad)))
        lin_row = jnp.pad(lin_row, ((0, 0), (0, pad)))

    # Selection matrix S^T (D, F*D): S^T[d, f*D + d] = 1  ->  per-field sums on MXU.
    sel = jnp.tile(jnp.eye(D, dtype=jnp.float32), (1, F))                 # (D, FD)

    # Weights transposed for batch-on-lane layout (column-vector biases).
    w1t = params["w1"].T                                                  # (h1, FD)
    b1c = params["b1"].reshape(h1, 1)
    w2t = params["w2"].T                                                  # (h2, h1)
    b2c = params["b2"].reshape(h2, 1)
    w3t = params["w3"].T                                                  # (1, h2)

    grid = (B_pad // BT,)

    def batch_spec(shp):
        return pl.BlockSpec((shp[0], BT), lambda i: (0, i))

    def resident(shp):
        return pl.BlockSpec(shp, lambda i: (0, 0))

    out = pl.pallas_call(
        deepfm_kernel,
        out_shape=jax.ShapeDtypeStruct((1, B_pad), jnp.float32),
        grid_spec=pltpu.PrefetchScalarGridSpec(
            num_scalar_prefetch=0,
            grid=grid,
            in_specs=[
                batch_spec(lin_row.shape),        # (1, BT) streamed
                batch_spec(x_t.shape),            # (FD, BT) streamed
                resident(sel.shape),              # resident across grid
                resident(w1t.shape), resident(b1c.shape),
                resident(w2t.shape), resident(b2c.shape),
                resident(w3t.shape),
            ],
            out_specs=pl.BlockSpec((1, BT), lambda i: (0, i)),
        ),
        compiler_params=pltpu.CompilerParams(
            dimension_semantics=("parallel",),
            vmem_limit_bytes=64 * 1024 * 1024,
        ),
    )(lin_row, x_t, sel, w1t, b1c, w2t, b2c, w3t)

    return out[:, :B].T                                                   # (B, 1)


def make_params(key, field_dims, embed_dim, deep_layers):
    F = len(field_dims)
    keys = jax.random.split(key, 2 * F + 6)
    embed_tables = [
        0.1 * jax.random.normal(keys[i], (field_dims[i], embed_dim), jnp.float32)
        for i in range(F)
    ]
    linear_tables = [
        0.1 * jax.random.normal(keys[F + i], (field_dims[i], 1), jnp.float32)
        for i in range(F)
    ]
    deep_in = F * embed_dim
    h1, h2 = deep_layers
    # Weights stored already transposed relative to nn.Linear: (in, out).
    w1 = 0.1 * jax.random.normal(keys[2 * F + 0], (deep_in, h1), jnp.float32)
    b1 = 0.01 * jax.random.normal(keys[2 * F + 1], (h1,), jnp.float32)
    w2 = 0.1 * jax.random.normal(keys[2 * F + 2], (h1, h2), jnp.float32)
    b2 = 0.01 * jax.random.normal(keys[2 * F + 3], (h2,), jnp.float32)
    w3 = 0.1 * jax.random.normal(keys[2 * F + 4], (h2, 1), jnp.float32)
    b3 = 0.01 * jax.random.normal(keys[2 * F + 5], (1,), jnp.float32)

    # Concatenate the per-field tables so a single gather suffices.
    offs, acc = [], 0
    for d in field_dims:
        offs.append(acc)
        acc += d
    field_offsets = jnp.asarray(offs, dtype=jnp.int32)
    embed_table = jnp.concatenate(embed_tables, axis=0)          # (sum(dims), D)
    linear_table = jnp.concatenate(linear_tables, axis=0)[:, 0]  # (sum(dims),)

    # TODO(synk): self.final_linear in the PyTorch module is unused in forward(); omitted.
    return dict(
        embed_table=embed_table,
        linear_table=linear_table,
        field_offsets=field_offsets,
        linear_bias=jnp.zeros((1,), jnp.float32),
        w1=w1, b1=b1, w2=w2, b2=b2, w3=w3, b3=b3,
    )


def deepfm_reference(x_idx, params):
    """Pure-JAX reference mirroring the PyTorch forward (eval-mode dropout)."""
    B, F = x_idx.shape
    flat_idx = x_idx + params["field_offsets"][None, :]
    lin_vals = jnp.take(params["linear_table"], flat_idx, axis=0)         # (B, F)
    linear_part = jnp.sum(lin_vals, axis=1, keepdims=True) + params["linear_bias"]
    x_embed = jnp.take(params["embed_table"], flat_idx, axis=0)           # (B, F, D)
    s = jnp.sum(x_embed, axis=1)
    fm_part = 0.5 * jnp.sum(s * s - jnp.sum(x_embed * x_embed, axis=1),
                            axis=1, keepdims=True)
    deep_in = x_embed.reshape(B, -1)
    h1 = jax.nn.relu(deep_in @ params["w1"] + params["b1"])
    h2 = jax.nn.relu(h1 @ params["w2"] + params["b2"])
    deep_out = h2 @ params["w3"] + params["b3"]
    return jax.nn.sigmoid(linear_part + fm_part + deep_out)


if __name__ == "__main__":
    field_dims = [11, 17, 23, 29]
    embed_dim = 8
    deep_layers = [128, 64]
    B = 8

    key = jax.random.PRNGKey(0)
    k_param, k_x = jax.random.split(key)
    params = make_params(k_param, field_dims, embed_dim, deep_layers)

    x_cols = []
    xkeys = jax.random.split(k_x, len(field_dims))
    for i, fd in enumerate(field_dims):
        x_cols.append(jax.random.randint(xkeys[i], (B,), 0, fd, dtype=jnp.int32))
    x_idx = jnp.stack(x_cols, axis=1)                                     # (B, num_fields)

    y = deepfm_forward(x_idx, params)
    jax.block_until_ready(y)

    y_ref = deepfm_reference(x_idx, params)
    assert y.shape == (B, 1), y.shape
    assert jnp.allclose(y, y_ref, atol=1e-5, rtol=1e-5), (y, y_ref)

    print("KERNEL_OK")
</pallas_src>

<mosaic_0001>
module attributes {stable_mosaic.version = 11 : i64} {
  func.func @deepfm_kernel(%arg0: i32, %arg1: memref<1x256xf32, #tpu.memory_space<vmem>>, %arg2: memref<32x256xf32, #tpu.memory_space<vmem>>, %arg3: memref<8x32xf32, #tpu.memory_space<vmem>>, %arg4: memref<128x32xf32, #tpu.memory_space<vmem>>, %arg5: memref<128x1xf32, #tpu.memory_space<vmem>>, %arg6: memref<64x128xf32, #tpu.memory_space<vmem>>, %arg7: memref<64x1xf32, #tpu.memory_space<vmem>>, %arg8: memref<1x64xf32, #tpu.memory_space<vmem>>, %arg9: memref<1x256xf32, #tpu.memory_space<vmem>>) attributes {dimension_semantics = [#tpu.dimension_semantics<parallel>], iteration_bounds = array<i64: 1>, scalar_prefetch = 0 : i64, scratch_operands = 0 : i64, tpu.core_type = #tpu.core_type<tc>, window_params = [{transform_indices = @transform_0, window_bounds = array<i64: 1, 256>}, {transform_indices = @transform_1, window_bounds = array<i64: 32, 256>}, {pipeline_mode = #tpu.pipeline_mode<synchronous>, transform_indices = @transform_2, window_bounds = array<i64: 8, 32>}, {pipeline_mode = #tpu.pipeline_mode<synchronous>, transform_indices = @transform_3, window_bounds = array<i64: 128, 32>}, {pipeline_mode = #tpu.pipeline_mode<synchronous>, transform_indices = @transform_4, window_bounds = array<i64: 128, 1>}, {pipeline_mode = #tpu.pipeline_mode<synchronous>, transform_indices = @transform_5, window_bounds = array<i64: 64, 128>}, {pipeline_mode = #tpu.pipeline_mode<synchronous>, transform_indices = @transform_6, window_bounds = array<i64: 64, 1>}, {pipeline_mode = #tpu.pipeline_mode<synchronous>, transform_indices = @transform_7, window_bounds = array<i64: 1, 64>}, {transform_indices = @transform_8, window_bounds = array<i64: 1, 256>}]} {
    %c0 = arith.constant 0 : index
    %c0_0 = arith.constant 0 : index
    %0 = vector.load %arg2[%c0, %c0_0] : memref<32x256xf32, #tpu.memory_space<vmem>>, vector<32x256xf32>
    %c0_1 = arith.constant 0 : index
    %c0_2 = arith.constant 0 : index
    %1 = vector.load %arg3[%c0_1, %c0_2] : memref<8x32xf32, #tpu.memory_space<vmem>>, vector<8x32xf32>
    %cst = arith.constant dense<0.000000e+00> : vector<8x256xf32>
    %2 = tpu.matmul %1, %0, %cst {dimension_numbers = #tpu.dot_dimension_numbers<[1], [0], [0], [1], [0, 0, 1, 1], [], []>} : vector<8x32xf32>, vector<32x256xf32>, vector<8x256xf32> -> vector<8x256xf32>
    %3 = arith.mulf %2, %2 : vector<8x256xf32>
    %cst_3 = arith.constant dense<0.000000e+00> : vector<256xf32>
    %4 = vector.multi_reduction <add>, %3, %cst_3 [0] : vector<8x256xf32> to vector<256xf32>
    %5 = vector.shape_cast %4 : vector<256xf32> to vector<1x256xf32>
    %6 = arith.mulf %0, %0 : vector<32x256xf32>
    %cst_4 = arith.constant dense<0.000000e+00> : vector<256xf32>
    %7 = vector.multi_reduction <add>, %6, %cst_4 [0] : vector<32x256xf32> to vector<256xf32>
    %8 = vector.shape_cast %7 : vector<256xf32> to vector<1x256xf32>
    %9 = arith.subf %5, %8 : vector<1x256xf32>
    %cst_5 = arith.constant 5.000000e-01 : f32
    %10 = vector.broadcast %cst_5 : f32 to vector<1x256xf32>
    %11 = arith.mulf %10, %9 : vector<1x256xf32>
    %c0_6 = arith.constant 0 : index
    %c0_7 = arith.constant 0 : index
    %12 = vector.load %arg4[%c0_6, %c0_7] : memref<128x32xf32, #tpu.memory_space<vmem>>, vector<128x32xf32>
    %cst_8 = arith.constant dense<0.000000e+00> : vector<128x256xf32>
    %13 = tpu.matmul %12, %0, %cst_8 {dimension_numbers = #tpu.dot_dimension_numbers<[1], [0], [0], [1], [0, 0, 1, 1], [], []>} : vector<128x32xf32>, vector<32x256xf32>, vector<128x256xf32> -> vector<128x256xf32>
    %c0_9 = arith.constant 0 : index
    %c0_10 = arith.constant 0 : index
    %14 = vector.load %arg5[%c0_9, %c0_10] : memref<128x1xf32, #tpu.memory_space<vmem>>, vector<128x1xf32>
    %15 = vector.broadcast %14 : vector<128x1xf32> to vector<128x256xf32>
    %16 = arith.addf %13, %15 : vector<128x256xf32>
    %cst_11 = arith.constant 0.000000e+00 : f32
    %17 = vector.broadcast %cst_11 : f32 to vector<128x256xf32>
    %18 = arith.maximumf %16, %17 : vector<128x256xf32>
    %c0_12 = arith.constant 0 : index
    %c0_13 = arith.constant 0 : index
    %19 = vector.load %arg6[%c0_12, %c0_13] : memref<64x128xf32, #tpu.memory_space<vmem>>, vector<64x128xf32>
    %cst_14 = arith.constant dense<0.000000e+00> : vector<64x256xf32>
    %20 = tpu.matmul %19, %18, %cst_14 {dimension_numbers = #tpu.dot_dimension_numbers<[1], [0], [0], [1], [0, 0, 1, 1], [], []>} : vector<64x128xf32>, vector<128x256xf32>, vector<64x256xf32> -> vector<64x256xf32>
    %c0_15 = arith.constant 0 : index
    %c0_16 = arith.constant 0 : index
    %21 = vector.load %arg7[%c0_15, %c0_16] : memref<64x1xf32, #tpu.memory_space<vmem>>, vector<64x1xf32>
    %22 = vector.broadcast %21 : vector<64x1xf32> to vector<64x256xf32>
    %23 = arith.addf %20, %22 : vector<64x256xf32>
    %cst_17 = arith.constant 0.000000e+00 : f32
    %24 = vector.broadcast %cst_17 : f32 to vector<64x256xf32>
    %25 = arith.maximumf %23, %24 : vector<64x256xf32>
    %c0_18 = arith.constant 0 : index
    %c0_19 = arith.constant 0 : index
    %26 = vector.load %arg8[%c0_18, %c0_19] : memref<1x64xf32, #tpu.memory_space<vmem>>, vector<1x64xf32>
    %cst_20 = arith.constant dense<0.000000e+00> : vector<1x256xf32>
    %27 = tpu.matmul %26, %25, %cst_20 {dimension_numbers = #tpu.dot_dimension_numbers<[1], [0], [0], [1], [0, 0, 1, 1], [], []>} : vector<1x64xf32>, vector<64x256xf32>, vector<1x256xf32> -> vector<1x256xf32>
    %c0_21 = arith.constant 0 : index
    %c0_22 = arith.constant 0 : index
    %28 = vector.load %arg1[%c0_21, %c0_22] : memref<1x256xf32, #tpu.memory_space<vmem>>, vector<1x256xf32>
    %29 = arith.addf %28, %11 : vector<1x256xf32>
    %30 = arith.addf %29, %27 : vector<1x256xf32>
    %31 = arith.negf %30 : vector<1x256xf32>
    %32 = math.exp %31 : vector<1x256xf32>
    %cst_23 = arith.constant 1.000000e+00 : f32
    %33 = vector.broadcast %cst_23 : f32 to vector<1x256xf32>
    %34 = arith.addf %33, %32 : vector<1x256xf32>
    %35 = arith.divf %33, %34 : vector<1x256xf32>
    %c0_24 = arith.constant 0 : index
    %c0_25 = arith.constant 0 : index
    %36 = vector.load %arg9[%c0_24, %c0_25] : memref<1x256xf32, #tpu.memory_space<vmem>>, vector<1x256xf32>
    tpu.vector_store %arg9[%c0_24, %c0_25], %35 {strides = array<i32>} : memref<1x256xf32, #tpu.memory_space<vmem>>, vector<1x256xf32>,
    return
  }
  func.func @transform_0(%arg0: i32) -> (i32, i32) {
    %c0_i32 = arith.constant 0 : i32
    %c0_i32_0 = arith.constant 0 : i32
    return %c0_i32, %arg0 : i32, i32
  }
  func.func @transform_1(%arg0: i32) -> (i32, i32) {
    %c0_i32 = arith.constant 0 : i32
    %c0_i32_0 = arith.constant 0 : i32
    return %c0_i32, %arg0 : i32, i32
  }
  func.func @transform_2(%arg0: i32) -> (i32, i32) {
    %c0_i32 = arith.constant 0 : i32
    %c0_i32_0 = arith.constant 0 : i32
    %c0_i32_1 = arith.constant 0 : i32
    return %c0_i32, %c0_i32_0 : i32, i32
  }
  func.func @transform_3(%arg0: i32) -> (i32, i32) {
    %c0_i32 = arith.constant 0 : i32
    %c0_i32_0 = arith.constant 0 : i32
    %c0_i32_1 = arith.constant 0 : i32
    return %c0_i32, %c0_i32_0 : i32, i32
  }
  func.func @transform_4(%arg0: i32) -> (i32, i32) {
    %c0_i32 = arith.constant 0 : i32
    %c0_i32_0 = arith.constant 0 : i32
    %c0_i32_1 = arith.constant 0 : i32
    return %c0_i32, %c0_i32_0 : i32, i32
  }
  func.func @transform_5(%arg0: i32) -> (i32, i32) {
    %c0_i32 = arith.constant 0 : i32
    %c0_i32_0 = arith.constant 0 : i32
    %c0_i32_1 = arith.constant 0 : i32
    return %c0_i32, %c0_i32_0 : i32, i32
  }
  func.func @transform_6(%arg0: i32) -> (i32, i32) {
    %c0_i32 = arith.constant 0 : i32
    %c0_i32_0 = arith.constant 0 : i32
    %c0_i32_1 = arith.constant 0 : i32
    return %c0_i32, %c0_i32_0 : i32, i32
  }
  func.func @transform_7(%arg0: i32) -> (i32, i32) {
    %c0_i32 = arith.constant 0 : i32
    %c0_i32_0 = arith.constant 0 : i32
    %c0_i32_1 = arith.constant 0 : i32
    return %c0_i32, %c0_i32_0 : i32, i32
  }
  func.func @transform_8(%arg0: i32) -> (i32, i32) {
    %c0_i32 = arith.constant 0 : i32
    %c0_i32_0 = arith.constant 0 : i32
    return %c0_i32, %arg0 : i32, i32
  }
}

</mosaic_0001>

<llo_original>
// kernel: tpu_custom_call.1
$region0: #{tpu_custom_call.1}
  #allocation0 [shape = 'u32[]', space=smem, size = 0x4, offset = 0x4, fixed_abs, tag = 'smem constant byte address 0x4 - core index']
  #allocation1 [shape = 'u32[144,128]{1,0:T(1,128)}', space=vmem, size = 0x12000, scoped, tag = 'internal scratch']
  %s0 = inlined_call_operand.hbm [shape: f32[1,256], index: 0, kind: input, shape index: {}]
  %s1 = inlined_call_operand.hbm [shape: f32[32,256], index: 1, kind: input, shape index: {}]
  %s2 = inlined_call_operand.hbm [shape: f32[8,32], index: 2, kind: input, shape index: {}]
  %s3 = inlined_call_operand.hbm [shape: f32[128,32], index: 3, kind: input, shape index: {}]
  %s4 = inlined_call_operand.hbm [shape: f32[128,1], index: 4, kind: input, shape index: {}]
  %s5 = inlined_call_operand.hbm [shape: f32[64,128], index: 5, kind: input, shape index: {}]
  %s6 = inlined_call_operand.hbm [shape: f32[64,1], index: 6, kind: input, shape index: {}]
  %s7 = inlined_call_operand.hbm [shape: f32[1,64], index: 7, kind: input, shape index: {}]
  %s8 = inlined_call_operand.hbm [shape: f32[1,256], index: 8, kind: output, shape index: {}]
  %s9 = sld [smem:[#allocation0]]
  $region74: #{tpu_custom_call.1} parent=0
    _
  %s11 = ssub.s32 1, %s9
  %s12 = scalar_select 0, %s11, %s9
  $region1: #{tpu_custom_call.1} parent=0
    #allocation2 [shape = 'u8[1024]{0}', space=vmem, size = 0x400, scoped, tag = 'input window, operand 0, single buffered']
    #allocation3 [shape = 's32[1]{0}', space=sflag, size = 0x4, scoped, tag = 'scoped memory for tpu_custom_call.1']
    #allocation4 [shape = 's32[1]{0}', space=sflag, size = 0x4, scoped, tag = 'scoped memory for tpu_custom_call.1']
    #allocation5 [shape = 'u8[32768]{0}', space=vmem, size = 0x8000, scoped, tag = 'input window, operand 1, single buffered']
    #allocation6 [shape = 's32[1]{0}', space=sflag, size = 0x4, scoped, tag = 'scoped memory for tpu_custom_call.1']
    #allocation7 [shape = 'u8[4096]{0}', space=vmem, size = 0x1000, scoped, tag = 'input window, operand 2, single buffered']
    #allocation8 [shape = 'u8[65536]{0}', space=vmem, size = 0x10000, scoped, tag = 'input window, operand 3, single buffered']
    #allocation9 [shape = 's32[1]{0}', space=sflag, size = 0x4, scoped, tag = 'scoped memory for tpu_custom_call.1']
    #allocation10 [shape = 'u8[65536]{0}', space=vmem, size = 0x10000, scoped, tag = 'input window, operand 4, single buffered']
    #allocation11 [shape = 'u8[32768]{0}', space=vmem, size = 0x8000, scoped, tag = 'input window, operand 5, single buffered']
    #allocation12 [shape = 's32[1]{0}', space=sflag, size = 0x4, scoped, tag = 'scoped memory for tpu_custom_call.1']
    #allocation13 [shape = 'u8[32768]{0}', space=vmem, size = 0x8000, scoped, tag = 'input window, operand 6, single buffered']
    #allocation14 [shape = 'u8[512]{0}', space=vmem, size = 0x400, scoped, tag = 'input window, operand 7, single buffered']
    #allocation15 [shape = 's32[1]{0}', space=sflag, size = 0x4, scoped, tag = 'scoped memory for tpu_custom_call.1']
    #allocation16 [shape = 'u8[1024]{0}', space=vmem, size = 0x400, scoped, tag = 'output window, operand 0, single buffered']
    %13 = vsyncpa [#allocation3], 0
    %14 = vsyncpa [#allocation6], 0
    %15 = vsyncpa [#allocation9], 0
    %16 = vsyncpa [#allocation12], 0
    %17 = vsyncpa [#allocation15], 0
    %18 = vsyncpa [#allocation4], 0
    // Predicated region
    $region2: #{tpu_custom_call.1} parent=1 // pred_check
      _
    $region3: #{tpu_custom_call.1} parent=1 // pred_check_branch
      %20 = sbr.rel (0) target = $region5
    $region4: #{tpu_custom_call.1} parent=1 // pred_region
      %s22 = ssub.s32 32, 32
      %23 = vsyncadd [#allocation3], %s22
      %s25 = sshll.u32 [#allocation2], 4
      %s26 = int_to_ptr.vmem [resolvable:$true] %s25
      %28 = dma.hbm_to_vmem [thread:$0]  %s0, 32, %s26, [#allocation3]
    $region5: #{tpu_custom_call.1} parent=1 // pred_fallthru
      _
    // Predicated region
    $region6: #{tpu_custom_call.1} parent=1 // pred_check
      _
    $region7: #{tpu_custom_call.1} parent=1 // pred_check_branch
      %30 = sbr.rel (0) target = $region9
    $region8: #{tpu_custom_call.1} parent=1 // pred_region
      %s32 = ssub.s32 1024, 1024
      %33 = vsyncadd [#allocation6], %s32
      %s34 = sshll.u32 [#allocation5], 4
      %s35 = int_to_ptr.vmem [resolvable:$true] %s34
      %40 = dma.hbm_to_vmem [thread:$0]  %s1, 1024, %s35, [#allocation6], 256, 256, 16
    $region9: #{tpu_custom_call.1} parent=1 // pred_fallthru
      _
    // Predicated region
    $region10: #{tpu_custom_call.1} parent=1 // pred_check
      _
    $region11: #{tpu_custom_call.1} parent=1 // pred_check_branch
      %42 = sbr.rel (0) target = $region13
    $region12: #{tpu_custom_call.1} parent=1 // pred_region
      %s44 = ssub.s32 128, 128
      %45 = vsyncadd [#allocation6], %s44
      %s47 = sshll.u32 [#allocation7], 4
      %s48 = int_to_ptr.vmem [resolvable:$true] %s47
      %50 = dma.hbm_to_vmem [thread:$0]  %s2, 128, %s48, [#allocation6]
    $region13: #{tpu_custom_call.1} parent=1 // pred_fallthru
      _
    // Predicated region
    $region14: #{tpu_custom_call.1} parent=1 // pred_check
      _
    $region15: #{tpu_custom_call.1} parent=1 // pred_check_branch
      %52 = sbr.rel (0) target = $region17
    $region16: #{tpu_custom_call.1} parent=1 // pred_region
      %s54 = ssub.s32 2048, 2048
      %55 = vsyncadd [#allocation9], %s54
      %s56 = sshll.u32 [#allocation8], 4
      %s57 = int_to_ptr.vmem [resolvable:$true] %s56
      %62 = dma.hbm_to_vmem [thread:$0]  %s3, 2048, %s57, [#allocation9], 128, 128, 8
    $region17: #{tpu_custom_call.1} parent=1 // pred_fallthru
      _
    // Predicated region
    $region18: #{tpu_custom_call.1} parent=1 // pred_check
      _
    $region19: #{tpu_custom_call.1} parent=1 // pred_check_branch
      %64 = sbr.rel (0) target = $region21
    $region20: #{tpu_custom_call.1} parent=1 // pred_region
      %s66 = ssub.s32 2048, 2048
      %67 = vsyncadd [#allocation9], %s66
      %s68 = sshll.u32 [#allocation10], 4
      %s69 = int_to_ptr.vmem [resolvable:$true] %s68
      %74 = dma.hbm_to_vmem [thread:$0]  %s4, 2048, %s69, [#allocation9], 128, 128, 8
    $region21: #{tpu_custom_call.1} parent=1 // pred_fallthru
      _
    // Predicated region
    $region22: #{tpu_custom_call.1} parent=1 // pred_check
      _
    $region23: #{tpu_custom_call.1} parent=1 // pred_check_branch
      %76 = sbr.rel (0) target = $region25
    $region24: #{tpu_custom_call.1} parent=1 // pred_region
      %s78 = ssub.s32 1024, 1024
      %79 = vsyncadd [#allocation12], %s78
      %s80 = sshll.u32 [#allocation11], 4
      %s81 = int_to_ptr.vmem [resolvable:$true] %s80
      %86 = dma.hbm_to_vmem [thread:$0]  %s5, 1024, %s81, [#allocation12], 128, 128, 8
    $region25: #{tpu_custom_call.1} parent=1 // pred_fallthru
      _
    // Predicated region
    $region26: #{tpu_custom_call.1} parent=1 // pred_check
      _
    $region27: #{tpu_custom_call.1} parent=1 // pred_check_branch
      %88 = sbr.rel (0) target = $region29
    $region28: #{tpu_custom_call.1} parent=1 // pred_region
      %s90 = ssub.s32 1024, 1024
      %91 = vsyncadd [#allocation12], %s90
      %s92 = sshll.u32 [#allocation13], 4
      %s93 = int_to_ptr.vmem [resolvable:$true] %s92
      %98 = dma.hbm_to_vmem [thread:$0]  %s6, 1024, %s93, [#allocation12], 128, 128, 8
    $region29: #{tpu_custom_call.1} parent=1 // pred_fallthru
      _
    // Predicated region
    $region30: #{tpu_custom_call.1} parent=1 // pred_check
      _
    $region31: #{tpu_custom_call.1} parent=1 // pred_check_branch
      %100 = sbr.rel (0) target = $region33
    $region32: #{tpu_custom_call.1} parent=1 // pred_region
      %s102 = ssub.s32 16, 16
      %103 = vsyncadd [#allocation15], %s102
      %s105 = sshll.u32 [#allocation14], 4
      %s106 = int_to_ptr.vmem [resolvable:$true] %s105
      %108 = dma.hbm_to_vmem [thread:$0]  %s7, 16, %s106, [#allocation15]
    $region33: #{tpu_custom_call.1} parent=1 // pred_fallthru
      _
    // Predicated region
    $region34: #{tpu_custom_call.1} parent=1 // pred_check
      _
    $region35: #{tpu_custom_call.1} parent=1 // pred_check_branch
      %110 = sbr.rel (0) target = $region37
    $region36: #{tpu_custom_call.1} parent=1 // pred_region
      %111 = dma.done [#allocation3], 32
    $region37: #{tpu_custom_call.1} parent=1 // pred_fallthru
      _
    // Predicated region
    $region38: #{tpu_custom_call.1} parent=1 // pred_check
      _
    $region39: #{tpu_custom_call.1} parent=1 // pred_check_branch
      %113 = sbr.rel (0) target = $region41
    $region40: #{tpu_custom_call.1} parent=1 // pred_region
      %114 = dma.done [#allocation6], 1024
    $region41: #{tpu_custom_call.1} parent=1 // pred_fallthru
      _
    // Predicated region
    $region42: #{tpu_custom_call.1} parent=1 // pred_check
      _
    $region43: #{tpu_custom_call.1} parent=1 // pred_check_branch
      %116 = sbr.rel (0) target = $region45
    $region44: #{tpu_custom_call.1} parent=1 // pred_region
      %117 = dma.done [#allocation6], 128
    $region45: #{tpu_custom_call.1} parent=1 // pred_fallthru
      _
    // Predicated region
    $region46: #{tpu_custom_call.1} parent=1 // pred_check
      _
    $region47: #{tpu_custom_call.1} parent=1 // pred_check_branch
      %119 = sbr.rel (0) target = $region49
    $region48: #{tpu_custom_call.1} parent=1 // pred_region
      %120 = dma.done [#allocation9], 2048
    $region49: #{tpu_custom_call.1} parent=1 // pred_fallthru
      _
    // Predicated region
    $region50: #{tpu_custom_call.1} parent=1 // pred_check
      _
    $region51: #{tpu_custom_call.1} parent=1 // pred_check_branch
      %122 = sbr.rel (0) target = $region53
    $region52: #{tpu_custom_call.1} parent=1 // pred_region
      %123 = dma.done [#allocation9], 2048
    $region53: #{tpu_custom_call.1} parent=1 // pred_fallthru
      _
    // Predicated region
    $region54: #{tpu_custom_call.1} parent=1 // pred_check
      _
    $region55: #{tpu_custom_call.1} parent=1 // pred_check_branch
      %125 = sbr.rel (0) target = $region57
    $region56: #{tpu_custom_call.1} parent=1 // pred_region
      %126 = dma.done [#allocation12], 1024
    $region57: #{tpu_custom_call.1} parent=1 // pred_fallthru
      _
    // Predicated region
    $region58: #{tpu_custom_call.1} parent=1 // pred_check
      _
    $region59: #{tpu_custom_call.1} parent=1 // pred_check_branch
      %128 = sbr.rel (0) target = $region61
    $region60: #{tpu_custom_call.1} parent=1 // pred_region
      %129 = dma.done [#allocation12], 1024
    $region61: #{tpu_custom_call.1} parent=1 // pred_fallthru
      _
    // Predicated region
    $region62: #{tpu_custom_call.1} parent=1 // pred_check
      _
    $region63: #{tpu_custom_call.1} parent=1 // pred_check_branch
      %131 = sbr.rel (0) target = $region65
    $region64: #{tpu_custom_call.1} parent=1 // pred_region
      %132 = dma.done [#allocation15], 16
    $region65: #{tpu_custom_call.1} parent=1 // pred_fallthru
      _
    %v133 = vld [vmem:[#allocation5] sm:$0xff]
    %v134 = vld [vmem:[#allocation5 + $0x8] sm:$0xff]
    %v135 = vld [vmem:[#allocation5 + $0x10] sm:$0xff]
    %v136 = vld [vmem:[#allocation5 + $0x18] sm:$0xff]
    %v137 = vld [vmem:[#allocation5 + $0x20] sm:$0xff]
    %v138 = vld [vmem:[#allocation5 + $0x28] sm:$0xff]
    %v139 = vld [vmem:[#allocation5 + $0x30] sm:$0xff]
    %v140 = vld [vmem:[#allocation5 + $0x38] sm:$0xff]
    %v141 = vld [vmem:[#allocation7] sm:$0xff]
    %vm142 = vcmask 261120
    %v144 = vsel %vm142, %v141, 0
    %146 = vmatprep.subr.mxu0 %v134
    %147 = vmatpush1.msra.mxu0 %v133
    %148 = vmatprep.subr.mxu0 %v136
    %149 = vmatpush1.msra.mxu0 %v135
    %150 = vmatprep.subr.mxu0 %v138
    %151 = vmatpush1.msra.mxu0 %v137
    %152 = vmatprep.subr.mxu0 %v140
    %153 = vmatpush1.msra.mxu0 %v139
    %154 = vmatprep.subr.mxu0 0.0
    %155 = vmatpush1.msra.mxu0 0.0
    %156 = vmatprep.subr.mxu0 0.0
    %157 = vmatpush1.msra.mxu0 0.0
    %158 = vmatprep.subr.mxu0 0.0
    %159 = vmatpush1.msra.mxu0 0.0
    %160 = vmatprep.subr.mxu0 0.0
    %161 = vmatpush1.msra.mxu0 0.0
    %162 = vmatprep.subr.mxu0 0.0
    %163 = vmatpush1.msra.mxu0 0.0
    %164 = vmatprep.subr.mxu0 0.0
    %165 = vmatpush1.msra.mxu0 0.0
    %166 = vmatprep.subr.mxu0 0.0
    %167 = vmatpush1.msra.mxu0 0.0
    %168 = vmatprep.subr.mxu0 0.0
    %169 = vmatpush1.msra.mxu0 0.0
    %170 = vmatprep.subr.mxu0 0.0
    %171 = vmatpush1.msra.mxu0 0.0
    %172 = vmatprep.subr.mxu0 0.0
    %173 = vmatpush1.msra.mxu0 0.0
    %174 = vmatprep.subr.mxu0 0.0
    %175 = vmatpush1.msra.mxu0 0.0
    %176 = vmatprep.subr.mxu0 0.0
    %177 = vmatpush1.msra.mxu0 0.0
    %178 = vmatprep.subr.mxu0 0.0
    %179 = vmatpush1.msra.mxu0 0.0
    %180 = vmatprep.subr.mxu0 0.0
    %181 = vmatpush1.msra.mxu0 0.0
    %182 = vmatprep.subr.mxu0 0.0
    %183 = vmatpush1.msra.mxu0 0.0
    %184 = vmatprep.subr.mxu0 0.0
    %185 = vmatpush1.msra.mxu0 0.0
    %186 = vmatprep.subr.mxu0 0.0
    %187 = vmatpush1.msra.mxu0 0.0
    %188 = vmatprep.subr.mxu0 0.0
    %189 = vmatpush1.msra.mxu0 0.0
    %190 = vmatprep.subr.mxu0 0.0
    %191 = vmatpush1.msra.mxu0 0.0
    %192 = vmatprep.subr.mxu0 0.0
    %193 = vmatpush1.msra.mxu0 0.0
    %194 = vmatprep.subr.mxu0 0.0
    %195 = vmatpush1.msra.mxu0 0.0
    %196 = vmatprep.subr.mxu0 0.0
    %197 = vmatpush1.msra.mxu0 0.0
    %198 = vmatprep.subr.mxu0 0.0
    %199 = vmatpush1.msra.mxu0 0.0
    %200 = vmatprep.subr.mxu0 0.0
    %201 = vmatpush1.msra.mxu0 0.0
    %202 = vmatprep.subr.mxu0 0.0
    %203 = vmatpush1.msra.mxu0 0.0
    %204 = vmatprep.subr.mxu0 0.0
    %205 = vmatpush1.msra.mxu0 0.0
    %206 = vmatprep.subr.mxu0 0.0
    %207 = vmatpush1.msra.mxu0 0.0
    %208 = vmatprep.subr.mxu0 0.0
    %209 = vmatpush1.msra.mxu0 0.0
    %210 = vmatprep.mubr.f32.mxu0 0.0
    %211 = vmatmul.mubr.f32.gmra.mrb[0].mxu0 %v144
    %v212 = vpop.f32.mrb[0].mxu0
    %v213 = vadd.f32 0.0, %v212
    %v214 = vpop.f32.mrb[0].mxu0
    %v215 = vadd.f32 0.0, %v214
    %216 = vdwg.mxu0
    %v217 = vmul.f32 %v213, %v213
    %v218 = vmul.f32 %v215, %v215
    %v219 = vrot.slane %v217, 4
    %v220 = vadd.f32 %v217, %v219
    %v221 = vrot.slane %v220, 2
    %v222 = vadd.f32 %v220, %v221
    %v223 = vrot.slane %v222, 1
    %v224 = vadd.f32 %v222, %v223
    %v225 = vrot.slane %v218, 4
    %v226 = vadd.f32 %v218, %v225
    %v227 = vrot.slane %v226, 2
    %v228 = vadd.f32 %v226, %v227
    %v229 = vrot.slane %v228, 1
    %v230 = vadd.f32 %v228, %v229
    %v231 = vmul.f32 %v133, %v133
    %v232 = vmul.f32 %v134, %v134
    %v233 = vmul.f32 %v135, %v135
    %v234 = vmul.f32 %v136, %v136
    %v235 = vmul.f32 %v137, %v137
    %v236 = vmul.f32 %v138, %v138
    %v237 = vmul.f32 %v139, %v139
    %v238 = vmul.f32 %v140, %v140
    %v239 = vadd.f32 %v231, %v233
    %v240 = vadd.f32 %v239, %v235
    %v241 = vadd.f32 %v240, %v237
    %v242 = vrot.slane %v241, 4
    %v243 = vadd.f32 %v241, %v242
    %v244 = vrot.slane %v243, 2
    %v245 = vadd.f32 %v243, %v244
    %v246 = vrot.slane %v245, 1
    %v247 = vadd.f32 %v245, %v246
    %v248 = vadd.f32 %v232, %v234
    %v249 = vadd.f32 %v248, %v236
    %v250 = vadd.f32 %v249, %v238
    %v251 = vrot.slane %v250, 4
    %v252 = vadd.f32 %v250, %v251
    %v253 = vrot.slane %v252, 2
    %v254 = vadd.f32 %v252, %v253
    %v255 = vrot.slane %v254, 1
    %v256 = vadd.f32 %v254, %v255
    %v257 = vsub.f32 %v224, %v247
    %v258 = vsub.f32 %v230, %v256
    %v259 = vmul.f32 %v257, 0.5
    %v260 = vmul.f32 %v258, 0.5
    %v261 = vld [vmem:[#allocation8] sm:$0xff]
    %v262 = vld [vmem:[#allocation8 + $0x8] sm:$0xff]
    %v263 = vld [vmem:[#allocation8 + $0x10] sm:$0xff]
    %v264 = vld [vmem:[#allocation8 + $0x18] sm:$0xff]
    %v265 = vld [vmem:[#allocation8 + $0x20] sm:$0xff]
    %v266 = vld [vmem:[#allocation8 + $0x28] sm:$0xff]
    %v267 = vld [vmem:[#allocation8 + $0x30] sm:$0xff]
    %v268 = vld [vmem:[#allocation8 + $0x38] sm:$0xff]
    %v269 = vld [vmem:[#allocation8 + $0x40] sm:$0xff]
    %v270 = vld [vmem:[#allocation8 + $0x48] sm:$0xff]
    %v271 = vld [vmem:[#allocation8 + $0x50] sm:$0xff]
    %v272 = vld [vmem:[#allocation8 + $0x58] sm:$0xff]
    %v273 = vld [vmem:[#allocation8 + $0x60] sm:$0xff]
    %v274 = vld [vmem:[#allocation8 + $0x68] sm:$0xff]
    %v275 = vld [vmem:[#allocation8 + $0x70] sm:$0xff]
    %v276 = vld [vmem:[#allocation8 + $0x78] sm:$0xff]
    %v277 = vld [vmem:[#allocation10] sm:$0xff]
    %v278 = vld [vmem:[#allocation10 + $0x8] sm:$0xff]
    %v279 = vld [vmem:[#allocation10 + $0x10] sm:$0xff]
    %v280 = vld [vmem:[#allocation10 + $0x18] sm:$0xff]
    %v281 = vld [vmem:[#allocation10 + $0x20] sm:$0xff]
    %v282 = vld [vmem:[#allocation10 + $0x28] sm:$0xff]
    %v283 = vld [vmem:[#allocation10 + $0x30] sm:$0xff]
    %v284 = vld [vmem:[#allocation10 + $0x38] sm:$0xff]
    %v285 = vld [vmem:[#allocation10 + $0x40] sm:$0xff]
    %v286 = vld [vmem:[#allocation10 + $0x48] sm:$0xff]
    %v287 = vld [vmem:[#allocation10 + $0x50] sm:$0xff]
    %v288 = vld [vmem:[#allocation10 + $0x58] sm:$0xff]
    %v289 = vld [vmem:[#allocation10 + $0x60] sm:$0xff]
    %v290 = vld [vmem:[#allocation10 + $0x68] sm:$0xff]
    %v291 = vld [vmem:[#allocation10 + $0x70] sm:$0xff]
    %v292 = vld [vmem:[#allocation10 + $0x78] sm:$0xff]
    %294 = vset.pattern.permute.xlu0 0
    %295 = vperm.xlu0 %294, %v277
    %v296 = vpop.permute.xlu0 %295
    %299 = vset.pattern.permute.xlu0 0
    %300 = vperm.xlu0 %299, %v278
    %v301 = vpop.permute.xlu0 %300
    %304 = vset.pattern.permute.xlu0 0
    %305 = vperm.xlu0 %304, %v279
    %v306 = vpop.permute.xlu0 %305
    %309 = vset.pattern.permute.xlu0 0
    %310 = vperm.xlu0 %309, %v280
    %v311 = vpop.permute.xlu0 %310
    %314 = vset.pattern.permute.xlu0 0
    %315 = vperm.xlu0 %314, %v281
    %v316 = vpop.permute.xlu0 %315
    %319 = vset.pattern.permute.xlu0 0
    %320 = vperm.xlu0 %319, %v282
    %v321 = vpop.permute.xlu0 %320
    %324 = vset.pattern.permute.xlu0 0
    %325 = vperm.xlu0 %324, %v283
    %v326 = vpop.permute.xlu0 %325
    %329 = vset.pattern.permute.xlu0 0
    %330 = vperm.xlu0 %329, %v284
    %v331 = vpop.permute.xlu0 %330
    %334 = vset.pattern.permute.xlu0 0
    %335 = vperm.xlu0 %334, %v285
    %v336 = vpop.permute.xlu0 %335
    %339 = vset.pattern.permute.xlu0 0
    %340 = vperm.xlu0 %339, %v286
    %v341 = vpop.permute.xlu0 %340
    %344 = vset.pattern.permute.xlu0 0
    %345 = vperm.xlu0 %344, %v287
    %v346 = vpop.permute.xlu0 %345
    %349 = vset.pattern.permute.xlu0 0
    %350 = vperm.xlu0 %349, %v288
    %v351 = vpop.permute.xlu0 %350
    %354 = vset.pattern.permute.xlu0 0
    %355 = vperm.xlu0 %354, %v289
    %v356 = vpop.permute.xlu0 %355
    %359 = vset.pattern.permute.xlu0 0
    %360 = vperm.xlu0 %359, %v290
    %v361 = vpop.permute.xlu0 %360
    %364 = vset.pattern.permute.xlu0 0
    %365 = vperm.xlu0 %364, %v291
    %v366 = vpop.permute.xlu0 %365
    %369 = vset.pattern.permute.xlu0 0
    %370 = vperm.xlu0 %369, %v292
    %v371 = vpop.permute.xlu0 %370
    %v374 = vsel %vm142, %v261, 0
    %v377 = vsel %vm142, %v262, 0
    %v380 = vsel %vm142, %v263, 0
    %v383 = vsel %vm142, %v264, 0
    %v386 = vsel %vm142, %v265, 0
    %v389 = vsel %vm142, %v266, 0
    %v392 = vsel %vm142, %v267, 0
    %v395 = vsel %vm142, %v268, 0
    %v398 = vsel %vm142, %v269, 0
    %v401 = vsel %vm142, %v270, 0
    %v404 = vsel %vm142, %v271, 0
    %v407 = vsel %vm142, %v272, 0
    %v410 = vsel %vm142, %v273, 0
    %v413 = vsel %vm142, %v274, 0
    %v416 = vsel %vm142, %v275, 0
    %v419 = vsel %vm142, %v276, 0
    %421 = vmatprep.subr.mxu0 %v134
    %422 = vmatpush1.msra.mxu0 %v133
    %423 = vmatprep.subr.mxu0 %v136
    %424 = vmatpush1.msra.mxu0 %v135
    %425 = vmatprep.subr.mxu0 %v138
    %426 = vmatpush1.msra.mxu0 %v137
    %427 = vmatprep.subr.mxu0 %v140
    %428 = vmatpush1.msra.mxu0 %v139
    %429 = vmatprep.subr.mxu0 0.0
    %430 = vmatpush1.msra.mxu0 0.0
    %431 = vmatprep.subr.mxu0 0.0
    %432 = vmatpush1.msra.mxu0 0.0
    %433 = vmatprep.subr.mxu0 0.0
    %434 = vmatpush1.msra.mxu0 0.0
    %435 = vmatprep.subr.mxu0 0.0
    %436 = vmatpush1.msra.mxu0 0.0
    %437 = vmatprep.subr.mxu0 0.0
    %438 = vmatpush1.msra.mxu0 0.0
    %439 = vmatprep.subr.mxu0 0.0
    %440 = vmatpush1.msra.mxu0 0.0
    %441 = vmatprep.subr.mxu0 0.0
    %442 = vmatpush1.msra.mxu0 0.0
    %443 = vmatprep.subr.mxu0 0.0
    %444 = vmatpush1.msra.mxu0 0.0
    %445 = vmatprep.subr.mxu0 0.0
    %446 = vmatpush1.msra.mxu0 0.0
    %447 = vmatprep.subr.mxu0 0.0
    %448 = vmatpush1.msra.mxu0 0.0
    %449 = vmatprep.subr.mxu0 0.0
    %450 = vmatpush1.msra.mxu0 0.0
    %451 = vmatprep.subr.mxu0 0.0
    %452 = vmatpush1.msra.mxu0 0.0
    %453 = vmatprep.subr.mxu0 0.0
    %454 = vmatpush1.msra.mxu0 0.0
    %455 = vmatprep.subr.mxu0 0.0
    %456 = vmatpush1.msra.mxu0 0.0
    %457 = vmatprep.subr.mxu0 0.0
    %458 = vmatpush1.msra.mxu0 0.0
    %459 = vmatprep.subr.mxu0 0.0
    %460 = vmatpush1.msra.mxu0 0.0
    %461 = vmatprep.subr.mxu0 0.0
    %462 = vmatpush1.msra.mxu0 0.0
    %463 = vmatprep.subr.mxu0 0.0
    %464 = vmatpush1.msra.mxu0 0.0
    %465 = vmatprep.subr.mxu0 0.0
    %466 = vmatpush1.msra.mxu0 0.0
    %467 = vmatprep.subr.mxu0 0.0
    %468 = vmatpush1.msra.mxu0 0.0
    %469 = vmatprep.subr.mxu0 0.0
    %470 = vmatpush1.msra.mxu0 0.0
    %471 = vmatprep.subr.mxu0 0.0
    %472 = vmatpush1.msra.mxu0 0.0
    %473 = vmatprep.subr.mxu0 0.0
    %474 = vmatpush1.msra.mxu0 0.0
    %475 = vmatprep.subr.mxu0 0.0
    %476 = vmatpush1.msra.mxu0 0.0
    %477 = vmatprep.subr.mxu0 0.0
    %478 = vmatpush1.msra.mxu0 0.0
    %479 = vmatprep.subr.mxu0 0.0
    %480 = vmatpush1.msra.mxu0 0.0
    %481 = vmatprep.subr.mxu0 0.0
    %482 = vmatpush1.msra.mxu0 0.0
    %483 = vmatprep.subr.mxu0 0.0
    %484 = vmatpush1.msra.mxu0 0.0
    %485 = vmatprep.mubr.f32.mxu0 0.0
    %486 = vmatmul.mubr.f32.gmra.mrb[0].mxu0 %v374
    %v487 = vpop.f32.mrb[0].mxu0
    %v488 = vadd.f32 %v296, %v487
    %v489 = vpop.f32.mrb[0].mxu0
    %v490 = vadd.f32 %v296, %v489
    %491 = vmatprep.mubr.f32.mxu0 0.0
    %492 = vmatmul.mubr.f32.gmra.mrb[0].mxu0 %v377
    %v493 = vpop.f32.mrb[0].mxu0
    %v494 = vadd.f32 %v301, %v493
    %v495 = vpop.f32.mrb[0].mxu0
    %v496 = vadd.f32 %v301, %v495
    %497 = vmatprep.mubr.f32.mxu0 0.0
    %498 = vmatmul.mubr.f32.gmra.mrb[0].mxu0 %v380
    %v499 = vpop.f32.mrb[0].mxu0
    %v500 = vadd.f32 %v306, %v499
    %v501 = vpop.f32.mrb[0].mxu0
    %v502 = vadd.f32 %v306, %v501
    %503 = vmatprep.mubr.f32.mxu0 0.0
    %504 = vmatmul.mubr.f32.gmra.mrb[0].mxu0 %v383
    %v505 = vpop.f32.mrb[0].mxu0
    %v506 = vadd.f32 %v311, %v505
    %v507 = vpop.f32.mrb[0].mxu0
    %v508 = vadd.f32 %v311, %v507
    %509 = vmatprep.mubr.f32.mxu0 0.0
    %510 = vmatmul.mubr.f32.gmra.mrb[0].mxu0 %v386
    %v511 = vpop.f32.mrb[0].mxu0
    %v512 = vadd.f32 %v316, %v511
    %v513 = vpop.f32.mrb[0].mxu0
    %v514 = vadd.f32 %v316, %v513
    %515 = vmatprep.mubr.f32.mxu0 0.0
    %516 = vmatmul.mubr.f32.gmra.mrb[0].mxu0 %v389
    %v517 = vpop.f32.mrb[0].mxu0
    %v518 = vadd.f32 %v321, %v517
    %v519 = vpop.f32.mrb[0].mxu0
    %v520 = vadd.f32 %v321, %v519
    %521 = vmatprep.mubr.f32.mxu0 0.0
    %522 = vmatmul.mubr.f32.gmra.mrb[0].mxu0 %v392
    %v523 = vpop.f32.mrb[0].mxu0
    %v524 = vadd.f32 %v326, %v523
    %v525 = vpop.f32.mrb[0].mxu0
    %v526 = vadd.f32 %v326, %v525
    %527 = vmatprep.mubr.f32.mxu0 0.0
    %528 = vmatmul.mubr.f32.gmra.mrb[0].mxu0 %v395
    %v529 = vpop.f32.mrb[0].mxu0
    %v530 = vadd.f32 %v331, %v529
    %v531 = vpop.f32.mrb[0].mxu0
    %v532 = vadd.f32 %v331, %v531
    %533 = vmatprep.mubr.f32.mxu0 0.0
    %534 = vmatmul.mubr.f32.gmra.mrb[0].mxu0 %v398
    %v535 = vpop.f32.mrb[0].mxu0
    %v536 = vadd.f32 %v336, %v535
    %v537 = vpop.f32.mrb[0].mxu0
    %v538 = vadd.f32 %v336, %v537
    %539 = vmatprep.mubr.f32.mxu0 0.0
    %540 = vmatmul.mubr.f32.gmra.mrb[0].mxu0 %v401
    %v541 = vpop.f32.mrb[0].mxu0
    %v542 = vadd.f32 %v341, %v541
    %v543 = vpop.f32.mrb[0].mxu0
    %v544 = vadd.f32 %v341, %v543
    %545 = vmatprep.mubr.f32.mxu0 0.0
    %546 = vmatmul.mubr.f32.gmra.mrb[0].mxu0 %v404
    %v547 = vpop.f32.mrb[0].mxu0
    %v548 = vadd.f32 %v346, %v547
    %v549 = vpop.f32.mrb[0].mxu0
    %v550 = vadd.f32 %v346, %v549
    %551 = vmatprep.mubr.f32.mxu0 0.0
    %552 = vmatmul.mubr.f32.gmra.mrb[0].mxu0 %v407
    %v553 = vpop.f32.mrb[0].mxu0
    %v554 = vadd.f32 %v351, %v553
    %v555 = vpop.f32.mrb[0].mxu0
    %v556 = vadd.f32 %v351, %v555
    %557 = vmatprep.mubr.f32.mxu0 0.0
    %558 = vmatmul.mubr.f32.gmra.mrb[0].mxu0 %v410
    %v559 = vpop.f32.mrb[0].mxu0
    %v560 = vadd.f32 %v356, %v559
    %v561 = vpop.f32.mrb[0].mxu0
    %v562 = vadd.f32 %v356, %v561
    %563 = vmatprep.mubr.f32.mxu0 0.0
    %564 = vmatmul.mubr.f32.gmra.mrb[0].mxu0 %v413
    %v565 = vpop.f32.mrb[0].mxu0
    %v566 = vadd.f32 %v361, %v565
    %v567 = vpop.f32.mrb[0].mxu0
    %v568 = vadd.f32 %v361, %v567
    %569 = vmatprep.mubr.f32.mxu0 0.0
    %570 = vmatmul.mubr.f32.gmra.mrb[0].mxu0 %v416
    %v571 = vpop.f32.mrb[0].mxu0
    %v572 = vadd.f32 %v366, %v571
    %v573 = vpop.f32.mrb[0].mxu0
    %v574 = vadd.f32 %v366, %v573
    %575 = vmatprep.mubr.f32.mxu0 0.0
    %576 = vmatmul.mubr.f32.gmra.mrb[0].mxu0 %v419
    %v577 = vpop.f32.mrb[0].mxu0
    %v578 = vadd.f32 %v371, %v577
    %v579 = vpop.f32.mrb[0].mxu0
    %v580 = vadd.f32 %v371, %v579
    %581 = vdwg.mxu0
    %v582 = vmax.f32 %v488, 0.0
    %v583 = vmax.f32 %v490, 0.0
    %v584 = vmax.f32 %v494, 0.0
    %v585 = vmax.f32 %v496, 0.0
    %v586 = vmax.f32 %v500, 0.0
    %v587 = vmax.f32 %v502, 0.0
    %v588 = vmax.f32 %v506, 0.0
    %v589 = vmax.f32 %v508, 0.0
    %v590 = vmax.f32 %v512, 0.0
    %v591 = vmax.f32 %v514, 0.0
    %v592 = vmax.f32 %v518, 0.0
    %v593 = vmax.f32 %v520, 0.0
    %v594 = vmax.f32 %v524, 0.0
    %v595 = vmax.f32 %v526, 0.0
    %v596 = vmax.f32 %v530, 0.0
    %v597 = vmax.f32 %v532, 0.0
    %v598 = vmax.f32 %v536, 0.0
    %v599 = vmax.f32 %v538, 0.0
    %v600 = vmax.f32 %v542, 0.0
    %v601 = vmax.f32 %v544, 0.0
    %v602 = vmax.f32 %v548, 0.0
    %v603 = vmax.f32 %v550, 0.0
    %v604 = vmax.f32 %v554, 0.0
    %v605 = vmax.f32 %v556, 0.0
    %v606 = vmax.f32 %v560, 0.0
    %v607 = vmax.f32 %v562, 0.0
    %v608 = vmax.f32 %v566, 0.0
    %v609 = vmax.f32 %v568, 0.0
    %v610 = vmax.f32 %v572, 0.0
    %v611 = vmax.f32 %v574, 0.0
    %v612 = vmax.f32 %v578, 0.0
    %v613 = vmax.f32 %v580, 0.0
    %v614 = vld [vmem:[#allocation11] sm:$0xff]
    %v615 = vld [vmem:[#allocation11 + $0x8] sm:$0xff]
    %v616 = vld [vmem:[#allocation11 + $0x10] sm:$0xff]
    %v617 = vld [vmem:[#allocation11 + $0x18] sm:$0xff]
    %v618 = vld [vmem:[#allocation11 + $0x20] sm:$0xff]
    %v619 = vld [vmem:[#allocation11 + $0x28] sm:$0xff]
    %v620 = vld [vmem:[#allocation11 + $0x30] sm:$0xff]
    %v621 = vld [vmem:[#allocation11 + $0x38] sm:$0xff]
    %v622 = vld [vmem:[#allocation13] sm:$0xff]
    %v623 = vld [vmem:[#allocation13 + $0x8] sm:$0xff]
    %v624 = vld [vmem:[#allocation13 + $0x10] sm:$0xff]
    %v625 = vld [vmem:[#allocation13 + $0x18] sm:$0xff]
    %v626 = vld [vmem:[#allocation13 + $0x20] sm:$0xff]
    %v627 = vld [vmem:[#allocation13 + $0x28] sm:$0xff]
    %v628 = vld [vmem:[#allocation13 + $0x30] sm:$0xff]
    %v629 = vld [vmem:[#allocation13 + $0x38] sm:$0xff]
    %631 = vset.pattern.permute.xlu0 0
    %632 = vperm.xlu0 %631, %v622
    %v633 = vpop.permute.xlu0 %632
    %636 = vset.pattern.permute.xlu0 0
    %637 = vperm.xlu0 %636, %v623
    %v638 = vpop.permute.xlu0 %637
    %641 = vset.pattern.permute.xlu0 0
    %642 = vperm.xlu0 %641, %v624
    %v643 = vpop.permute.xlu0 %642
    %646 = vset.pattern.permute.xlu0 0
    %647 = vperm.xlu0 %646, %v625
    %v648 = vpop.permute.xlu0 %647
    %651 = vset.pattern.permute.xlu0 0
    %652 = vperm.xlu0 %651, %v626
    %v653 = vpop.permute.xlu0 %652
    %656 = vset.pattern.permute.xlu0 0
    %657 = vperm.xlu0 %656, %v627
    %v658 = vpop.permute.xlu0 %657
    %661 = vset.pattern.permute.xlu0 0
    %662 = vperm.xlu0 %661, %v628
    %v663 = vpop.permute.xlu0 %662
    %666 = vset.pattern.permute.xlu0 0
    %667 = vperm.xlu0 %666, %v629
    %v668 = vpop.permute.xlu0 %667
    %670 = vmatprep.subr.mxu0 %v583
    %671 = vmatpush1.msra.mxu0 %v582
    %672 = vmatprep.subr.mxu0 %v585
    %673 = vmatpush1.msra.mxu0 %v584
    %674 = vmatprep.subr.mxu0 %v587
    %675 = vmatpush1.msra.mxu0 %v586
    %676 = vmatprep.subr.mxu0 %v589
    %677 = vmatpush1.msra.mxu0 %v588
    %678 = vmatprep.subr.mxu0 %v591
    %679 = vmatpush1.msra.mxu0 %v590
    %680 = vmatprep.subr.mxu0 %v593
    %681 = vmatpush1.msra.mxu0 %v592
    %682 = vmatprep.subr.mxu0 %v595
    %683 = vmatpush1.msra.mxu0 %v594
    %684 = vmatprep.subr.mxu0 %v597
    %685 = vmatpush1.msra.mxu0 %v596
    %686 = vmatprep.subr.mxu0 %v599
    %687 = vmatpush1.msra.mxu0 %v598
    %688 = vmatprep.subr.mxu0 %v601
    %689 = vmatpush1.msra.mxu0 %v600
    %690 = vmatprep.subr.mxu0 %v603
    %691 = vmatpush1.msra.mxu0 %v602
    %692 = vmatprep.subr.mxu0 %v605
    %693 = vmatpush1.msra.mxu0 %v604
    %694 = vmatprep.subr.mxu0 %v607
    %695 = vmatpush1.msra.mxu0 %v606
    %696 = vmatprep.subr.mxu0 %v609
    %697 = vmatpush1.msra.mxu0 %v608
    %698 = vmatprep.subr.mxu0 %v611
    %699 = vmatpush1.msra.mxu0 %v610
    %700 = vmatprep.subr.mxu0 %v613
    %701 = vmatpush1.msra.mxu0 %v612
    %702 = vmatprep.subr.mxu0 0.0
    %703 = vmatpush1.msra.mxu0 0.0
    %704 = vmatprep.subr.mxu0 0.0
    %705 = vmatpush1.msra.mxu0 0.0
    %706 = vmatprep.subr.mxu0 0.0
    %707 = vmatpush1.msra.mxu0 0.0
    %708 = vmatprep.subr.mxu0 0.0
    %709 = vmatpush1.msra.mxu0 0.0
    %710 = vmatprep.subr.mxu0 0.0
    %711 = vmatpush1.msra.mxu0 0.0
    %712 = vmatprep.subr.mxu0 0.0
    %713 = vmatpush1.msra.mxu0 0.0
    %714 = vmatprep.subr.mxu0 0.0
    %715 = vmatpush1.msra.mxu0 0.0
    %716 = vmatprep.subr.mxu0 0.0
    %717 = vmatpush1.msra.mxu0 0.0
    %718 = vmatprep.subr.mxu0 0.0
    %719 = vmatpush1.msra.mxu0 0.0
    %720 = vmatprep.subr.mxu0 0.0
    %721 = vmatpush1.msra.mxu0 0.0
    %722 = vmatprep.subr.mxu0 0.0
    %723 = vmatpush1.msra.mxu0 0.0
    %724 = vmatprep.subr.mxu0 0.0
    %725 = vmatpush1.msra.mxu0 0.0
    %726 = vmatprep.subr.mxu0 0.0
    %727 = vmatpush1.msra.mxu0 0.0
    %728 = vmatprep.subr.mxu0 0.0
    %729 = vmatpush1.msra.mxu0 0.0
    %730 = vmatprep.subr.mxu0 0.0
    %731 = vmatpush1.msra.mxu0 0.0
    %732 = vmatprep.subr.mxu0 0.0
    %733 = vmatpush1.msra.mxu0 0.0
    %734 = vmatprep.mubr.f32.mxu0 0.0
    %735 = vmatmul.mubr.f32.gmra.mrb[0].mxu0 %v614
    %v736 = vpop.f32.mrb[0].mxu0
    %v737 = vadd.f32 %v633, %v736
    %v738 = vpop.f32.mrb[0].mxu0
    %v739 = vadd.f32 %v633, %v738
    %740 = vmatprep.mubr.f32.mxu0 0.0
    %741 = vmatmul.mubr.f32.gmra.mrb[0].mxu0 %v615
    %v742 = vpop.f32.mrb[0].mxu0
    %v743 = vadd.f32 %v638, %v742
    %v744 = vpop.f32.mrb[0].mxu0
    %v745 = vadd.f32 %v638, %v744
    %746 = vmatprep.mubr.f32.mxu0 0.0
    %747 = vmatmul.mubr.f32.gmra.mrb[0].mxu0 %v616
    %v748 = vpop.f32.mrb[0].mxu0
    %v749 = vadd.f32 %v643, %v748
    %v750 = vpop.f32.mrb[0].mxu0
    %v751 = vadd.f32 %v643, %v750
    %752 = vmatprep.mubr.f32.mxu0 0.0
    %753 = vmatmul.mubr.f32.gmra.mrb[0].mxu0 %v617
    %v754 = vpop.f32.mrb[0].mxu0
    %v755 = vadd.f32 %v648, %v754
    %v756 = vpop.f32.mrb[0].mxu0
    %v757 = vadd.f32 %v648, %v756
    %758 = vmatprep.mubr.f32.mxu0 0.0
    %759 = vmatmul.mubr.f32.gmra.mrb[0].mxu0 %v618
    %v760 = vpop.f32.mrb[0].mxu0
    %v761 = vadd.f32 %v653, %v760
    %v762 = vpop.f32.mrb[0].mxu0
    %v763 = vadd.f32 %v653, %v762
    %764 = vmatprep.mubr.f32.mxu0 0.0
    %765 = vmatmul.mubr.f32.gmra.mrb[0].mxu0 %v619
    %v766 = vpop.f32.mrb[0].mxu0
    %v767 = vadd.f32 %v658, %v766
    %v768 = vpop.f32.mrb[0].mxu0
    %v769 = vadd.f32 %v658, %v768
    %770 = vmatprep.mubr.f32.mxu0 0.0
    %771 = vmatmul.mubr.f32.gmra.mrb[0].mxu0 %v620
    %v772 = vpop.f32.mrb[0].mxu0
    %v773 = vadd.f32 %v663, %v772
    %v774 = vpop.f32.mrb[0].mxu0
    %v775 = vadd.f32 %v663, %v774
    %776 = vmatprep.mubr.f32.mxu0 0.0
    %777 = vmatmul.mubr.f32.gmra.mrb[0].mxu0 %v621
    %v778 = vpop.f32.mrb[0].mxu0
    %v779 = vadd.f32 %v668, %v778
    %v780 = vpop.f32.mrb[0].mxu0
    %v781 = vadd.f32 %v668, %v780
    %782 = vdwg.mxu0
    %v783 = vmax.f32 %v737, 0.0
    %v784 = vmax.f32 %v739, 0.0
    %v785 = vmax.f32 %v743, 0.0
    %v786 = vmax.f32 %v745, 0.0
    %v787 = vmax.f32 %v749, 0.0
    %v788 = vmax.f32 %v751, 0.0
    %v789 = vmax.f32 %v755, 0.0
    %v790 = vmax.f32 %v757, 0.0
    %v791 = vmax.f32 %v761, 0.0
    %v792 = vmax.f32 %v763, 0.0
    %v793 = vmax.f32 %v767, 0.0
    %v794 = vmax.f32 %v769, 0.0
    %v795 = vmax.f32 %v773, 0.0
    %v796 = vmax.f32 %v775, 0.0
    %v797 = vmax.f32 %v779, 0.0
    %v798 = vmax.f32 %v781, 0.0
    %v799 = vld [vmem:[#allocation14] sm:$0x1]
    %vm800 = vcmask 523264
    %v802 = vsel %vm800, %v799, 0
    %804 = vmatprep.subr.mxu0 %v784
    %805 = vmatpush1.msra.mxu0 %v783
    %806 = vmatprep.subr.mxu0 %v786
    %807 = vmatpush1.msra.mxu0 %v785
    %808 = vmatprep.subr.mxu0 %v788
    %809 = vmatpush1.msra.mxu0 %v787
    %810 = vmatprep.subr.mxu0 %v790
    %811 = vmatpush1.msra.mxu0 %v789
    %812 = vmatprep.subr.mxu0 %v792
    %813 = vmatpush1.msra.mxu0 %v791
    %814 = vmatprep.subr.mxu0 %v794
    %815 = vmatpush1.msra.mxu0 %v793
    %816 = vmatprep.subr.mxu0 %v796
    %817 = vmatpush1.msra.mxu0 %v795
    %818 = vmatprep.subr.mxu0 %v798
    %819 = vmatpush1.msra.mxu0 %v797
    %820 = vmatprep.subr.mxu0 0.0
    %821 = vmatpush1.msra.mxu0 0.0
    %822 = vmatprep.subr.mxu0 0.0
    %823 = vmatpush1.msra.mxu0 0.0
    %824 = vmatprep.subr.mxu0 0.0
    %825 = vmatpush1.msra.mxu0 0.0
    %826 = vmatprep.subr.mxu0 0.0
    %827 = vmatpush1.msra.mxu0 0.0
    %828 = vmatprep.subr.mxu0 0.0
    %829 = vmatpush1.msra.mxu0 0.0
    %830 = vmatprep.subr.mxu0 0.0
    %831 = vmatpush1.msra.mxu0 0.0
    %832 = vmatprep.subr.mxu0 0.0
    %833 = vmatpush1.msra.mxu0 0.0
    %834 = vmatprep.subr.mxu0 0.0
    %835 = vmatpush1.msra.mxu0 0.0
    %836 = vmatprep.subr.mxu0 0.0
    %837 = vmatpush1.msra.mxu0 0.0
    %838 = vmatprep.subr.mxu0 0.0
    %839 = vmatpush1.msra.mxu0 0.0
    %840 = vmatprep.subr.mxu0 0.0
    %841 = vmatpush1.msra.mxu0 0.0
    %842 = vmatprep.subr.mxu0 0.0
    %843 = vmatpush1.msra.mxu0 0.0
    %844 = vmatprep.subr.mxu0 0.0
    %845 = vmatpush1.msra.mxu0 0.0
    %846 = vmatprep.subr.mxu0 0.0
    %847 = vmatpush1.msra.mxu0 0.0
    %848 = vmatprep.subr.mxu0 0.0
    %849 = vmatpush1.msra.mxu0 0.0
    %850 = vmatprep.subr.mxu0 0.0
    %851 = vmatpush1.msra.mxu0 0.0
    %852 = vmatprep.subr.mxu0 0.0
    %853 = vmatpush1.msra.mxu0 0.0
    %854 = vmatprep.subr.mxu0 0.0
    %855 = vmatpush1.msra.mxu0 0.0
    %856 = vmatprep.subr.mxu0 0.0
    %857 = vmatpush1.msra.mxu0 0.0
    %858 = vmatprep.subr.mxu0 0.0
    %859 = vmatpush1.msra.mxu0 0.0
    %860 = vmatprep.subr.mxu0 0.0
    %861 = vmatpush1.msra.mxu0 0.0
    %862 = vmatprep.subr.mxu0 0.0
    %863 = vmatpush1.msra.mxu0 0.0
    %864 = vmatprep.subr.mxu0 0.0
    %865 = vmatpush1.msra.mxu0 0.0
    %866 = vmatprep.subr.mxu0 0.0
    %867 = vmatpush1.msra.mxu0 0.0
    %868 = vmatprep.mubr.f32.mxu0 0.0
    %869 = vmatmul.mubr.f32.gmra.mrb[0].mxu0 %v802
    %v870 = vpop.f32.mrb[0].mxu0
    %v871 = vadd.f32 0.0, %v870
    %v872 = vpop.f32.mrb[0].mxu0
    %v873 = vadd.f32 0.0, %v872
    %874 = vdwg.mxu0
    %v875 = vld [vmem:[#allocation2] sm:$0x3]
    %v878 = vcombine.low %v259, %v260
    %v880 = vunpack.c.l.s4 1966171168
    %v881 = vunpack.c.0.s8 %v880
    %v882 = vlaneseq
    %v883 = vshrl.u32 %v882, 7
    %v884 = vsub.s32 %v881, %v883
    %v885 = vrot.slane %v878, %v884
    %v887 = vunpack.c.l.s4 1966171168
    %v888 = vunpack.c.0.s8 %v887
    %v889 = vlaneseq
    %v890 = vshrl.u32 %v889, 7
    %v891 = vsub.s32 %v888, %v890
    %v892 = vrot.slane %v885, %v891
    %v894 = vadd.f32 %v875, %v892
    %v897 = vcombine.low %v871, %v873
    %v899 = vunpack.c.l.s4 1966171168
    %v900 = vunpack.c.0.s8 %v899
    %v901 = vlaneseq
    %v902 = vshrl.u32 %v901, 7
    %v903 = vsub.s32 %v900, %v902
    %v904 = vrot.slane %v897, %v903
    %v906 = vunpack.c.l.s4 1966171168
    %v907 = vunpack.c.0.s8 %v906
    %v908 = vlaneseq
    %v909 = vshrl.u32 %v908, 7
    %v910 = vsub.s32 %v907, %v909
    %v911 = vrot.slane %v904, %v910
    %v913 = vadd.f32 %v894, %v911
    %v914 = vxor.u32 %v913, 2147483648
    %v915 = vmul.f32 %v914, 1.442695
    %v916 = vpow.pop %v915
    %v917 = vadd.f32 %v916, 1.0
    %v918 = vrcp.pop %v917
    %v919 = vmul.f32 1.0, %v918
    %v920 = vlaneseq
    %vm921 = vcmp.ge.s32.totalorder %v920, 0
    %vm922 = vcmp.lt.s32.totalorder %v920, 256
    %vm923 = vmand %vm921, %vm922
    %924 = vst.msk [vmem:[#allocation16] sm:$0x3] %vm923, %v919
    // Predicated region
    $region66: #{tpu_custom_call.1} parent=1 // pred_check
      _
    $region67: #{tpu_custom_call.1} parent=1 // pred_check_branch
      %926 = sbr.rel (0) target = $region69
    $region68: #{tpu_custom_call.1} parent=1 // pred_region
      %s928 = ssub.s32 32, 32
      %929 = vsyncadd [#allocation4], %s928
      %s931 = sshll.u32 [#allocation16], 4
      %s932 = int_to_ptr.vmem [resolvable:$true] %s931
      %934 = dma.vmem_to_hbm [thread:$0]  %s932, 32, %s8, [#allocation4]
    $region69: #{tpu_custom_call.1} parent=1 // pred_fallthru
      _
    // Predicated region
    $region70: #{tpu_custom_call.1} parent=1 // pred_check
      _
    $region71: #{tpu_custom_call.1} parent=1 // pred_check_branch
      %936 = sbr.rel (0) target = $region73
    $region72: #{tpu_custom_call.1} parent=1 // pred_region
      %937 = dma.done [#allocation4], 32
    $region73: #{tpu_custom_call.1} parent=1 // pred_fallthru
      _
    %938 = vsyncpa [#allocation3], 1
    %939 = vsyncpa [#allocation6], 1
    %940 = vsyncpa [#allocation9], 1
    %941 = vsyncpa [#allocation12], 1
    %942 = vsyncpa [#allocation15], 1
    %943 = vsyncpa [#allocation4], 1

</llo_original>
